<compile_context>
chip_gen: v7x
topology: tpu7x:2x2x1
jax: 0.10.0
libtpu: 0.0.40
codegen_flags: <defaults>
</compile_context>

<pallas_src>
import jax
import jax.numpy as jnp
from jax.experimental import pallas as pl
from jax.experimental.pallas import tpu as pltpu


def _round_up(x, m):
    return (x + m - 1) // m * m


def _patch_embed_kernel(x_ref, w_ref, b_ref, o_ref):
    # x_ref: (TM, Kp)  streamed patch-row tile (bf16 or f32)
    # w_ref: (Ep, Kp)  resident weight (constant index_map -> fetched once)
    # b_ref: (1, Ep)   resident f32 bias
    # o_ref: (TM, Ep)  output tile
    acc = jax.lax.dot_general(
        x_ref[...], w_ref[...],
        dimension_numbers=(((1,), (1,)), ((), ())),   # transposed-B, MXU-native
        preferred_element_type=jnp.float32)
    o_ref[...] = (acc + b_ref[...]).astype(o_ref.dtype)


def patch_embedding_forward(x, weight, bias, patch_size, *,
                            tile_m=1024, compute_dtype=jnp.bfloat16,
                            vmem_budget_bytes=24 * 1024 * 1024):
    """
    x:      (B, C, H, W)    NCHW, matching the PyTorch module
    weight: (E, C, ph, pw)  Conv2d weight (stride == kernel == patch)
    bias:   (E,)            Conv2d bias
    returns (B, num_patches, E) == proj(x).flatten(2).transpose(1, 2)

    tile_m:        max rows of the patch matrix per grid step.
    compute_dtype: MXU operand dtype (default bf16, f32 accumulate + f32 bias
                   + f32 output). Pass None (or jnp.float32) for strict f32.
    """
    B, C, H, W = x.shape
    E = weight.shape[0]
    ph, pw = patch_size
    assert H % ph == 0 and W % pw == 0
    Hp, Wp = H // ph, W // pw
    num_patches = Hp * Wp
    K = C * ph * pw
    M = B * num_patches
    out_dtype = x.dtype
    in_dtype = jnp.dtype(compute_dtype) if compute_dtype is not None else jnp.dtype(x.dtype)

    # --- patchify glue (reshape/transpose; feature order (c, ph, pw) matches
    #     the flattened Conv2d weight). With allow_input_fusion on operand 0,
    #     XLA fuses this producer into the pallas_call so no M x K intermediate
    #     is materialized in HBM. ------------------------------------------
    patches = x.reshape(B, C, Hp, ph, Wp, pw)
    patches = patches.transpose(0, 2, 4, 1, 3, 5).reshape(M, K)

    w_mat = weight.reshape(E, K)                      # (E, K), no transpose pass
    b_mat = bias.reshape(1, E).astype(jnp.float32)

    # --- pad to TPU-friendly shapes (lane-dense output, aligned K/E) -------
    K_pad = _round_up(K, 128)
    E_pad = _round_up(E, 128)
    align = 16 if jnp.dtype(in_dtype).itemsize < 4 else 8  # bf16: 2 rows/sublane

    # Split M over >= 2 grid steps when possible (v7x megacore), cap by tile_m.
    TM = min(int(tile_m), _round_up(max(-(-M // 2), 1), align))
    TM = max(align, _round_up(TM, align))

    in_bytes = jnp.dtype(in_dtype).itemsize
    out_bytes = jnp.dtype(out_dtype).itemsize

    def _vmem_estimate(tm):
        return (2 * tm * K_pad * in_bytes          # streamed patches (double buffered)
                + 2 * E_pad * K_pad * in_bytes     # resident weight buffers
                + 2 * E_pad * 4                    # resident bias buffers
                + 2 * tm * E_pad * out_bytes)      # output (double buffered)

    while TM > align and _vmem_estimate(TM) > vmem_budget_bytes:
        TM = max(align, _round_up(TM // 2, align))
    # TODO(synk): add an inner "arbitrary" K grid axis + f32 VMEM accumulator
    # if K_pad * E_pad itself ever outgrows the VMEM budget (huge patches / E).

    M_pad = _round_up(M, TM)

    if (M_pad, K_pad) != (M, K):
        patches = jnp.pad(patches, ((0, M_pad - M), (0, K_pad - K)))
    if (E_pad, K_pad) != (E, K):
        w_mat = jnp.pad(w_mat, ((0, E_pad - E), (0, K_pad - K)))
    if E_pad != E:
        b_mat = jnp.pad(b_mat, ((0, 0), (0, E_pad - E)))

    if patches.dtype != in_dtype:
        patches = patches.astype(in_dtype)   # part of the fused operand-0 producer
    if w_mat.dtype != in_dtype:
        w_mat = w_mat.astype(in_dtype)

    grid = (M_pad // TM,)
    cost = pl.CostEstimate(
        flops=2 * M_pad * K_pad * E_pad,
        transcendentals=0,
        bytes_accessed=(M_pad * K_pad * in_bytes + E_pad * K_pad * in_bytes
                        + E_pad * 4 + M_pad * E_pad * out_bytes),
    )

    out = pl.pallas_call(
        _patch_embed_kernel,
        out_shape=jax.ShapeDtypeStruct((M_pad, E_pad), out_dtype),
        grid_spec=pltpu.PrefetchScalarGridSpec(
            num_scalar_prefetch=0,
            grid=grid,
            in_specs=[
                # patch-row tile: streamed / double-buffered over M
                pl.BlockSpec((TM, K_pad), lambda i: (i, 0)),
                # weight: constant block index -> resident across all M tiles
                pl.BlockSpec((E_pad, K_pad), lambda i: (0, 0)),
                # bias: resident
                pl.BlockSpec((1, E_pad), lambda i: (0, 0)),
            ],
            out_specs=pl.BlockSpec((TM, E_pad), lambda i: (i, 0)),
        ),
        compiler_params=pltpu.CompilerParams(
            dimension_semantics=("parallel",),          # megacore on v7x
            allow_input_fusion=[True, False, False],    # fuse patchify producer
            vmem_limit_bytes=48 * 1024 * 1024,          # above scoped defaults, safe on all
        ),
        cost_estimate=cost,
    )(patches, w_mat, b_mat)

    if (M_pad, E_pad) != (M, E):
        out = out[:M, :E]
    return out.reshape(B, num_patches, E)


def _reference(x, weight, bias, patch):
    B, C, H, W = x.shape
    E = weight.shape[0]
    ref = jax.lax.conv_general_dilated(
        x, weight, window_strides=patch, padding="VALID",
        dimension_numbers=("NCHW", "OIHW", "NCHW"))
    ref = ref + bias.reshape(1, E, 1, 1)
    return ref.reshape(B, E, -1).transpose(0, 2, 1)


if __name__ == "__main__":
    key = jax.random.PRNGKey(0)

    # --- case 1: module-consistent small config, default bf16 compute ------
    # img_size=(16,16), patch=8, in_channels=4, embed_dim=32 -> num_patches=4
    B, C, H, W = 2, 4, 16, 16
    patch = (8, 8)
    E = 32
    k1, k2, k3, key = jax.random.split(key, 4)
    fan_in = C * patch[0] * patch[1]
    bound = 1.0 / (fan_in ** 0.5)
    x = jax.random.normal(k1, (B, C, H, W), dtype=jnp.float32)
    weight = jax.random.uniform(k2, (E, C, patch[0], patch[1]),
                                minval=-bound, maxval=bound, dtype=jnp.float32)
    bias = jax.random.uniform(k3, (E,), minval=-bound, maxval=bound,
                              dtype=jnp.float32)

    ref = _reference(x, weight, bias, patch)

    out_bf16 = jax.block_until_ready(
        patch_embedding_forward(x, weight, bias, patch))
    assert out_bf16.shape == (B, (H // patch[0]) * (W // patch[1]), E)
    assert out_bf16.dtype == x.dtype
    # bf16 operands (f32 accumulate) -> loose tolerance vs f32 conv reference
    assert jnp.allclose(out_bf16, ref, atol=5e-2, rtol=5e-2)

    # --- case 1b: strict f32 path (tight tolerance) -------------------------
    out_f32 = jax.block_until_ready(
        patch_embedding_forward(x, weight, bias, patch, compute_dtype=None))
    assert jnp.allclose(out_f32, ref, atol=1e-4, rtol=1e-4)

    # --- case 2: multi-tile grid (grid=(4,)) + K/E padding (192->256, 48->128)
    B2, C2, H2, W2 = 1, 3, 64, 64
    patch2 = (8, 8)
    E2 = 48
    k1, k2, k3, key = jax.random.split(key, 4)
    fan_in2 = C2 * patch2[0] * patch2[1]
    bound2 = 1.0 / (fan_in2 ** 0.5)
    x2 = jax.random.normal(k1, (B2, C2, H2, W2), dtype=jnp.float32)
    w2 = jax.random.uniform(k2, (E2, C2, patch2[0], patch2[1]),
                            minval=-bound2, maxval=bound2, dtype=jnp.float32)
    b2 = jax.random.uniform(k3, (E2,), minval=-bound2, maxval=bound2,
                            dtype=jnp.float32)

    out2 = jax.block_until_ready(
        patch_embedding_forward(x2, w2, b2, patch2, tile_m=16))
    ref2 = _reference(x2, w2, b2, patch2)
    assert out2.shape == (B2, (H2 // 8) * (W2 // 8), E2)
    assert jnp.allclose(out2, ref2, atol=5e-2, rtol=5e-2)

    print("KERNEL_OK")
</pallas_src>

<mosaic_0001>
module attributes {stable_mosaic.version = 11 : i64} {
  func.func @_patch_embed_kernel(%arg0: i32, %arg1: memref<16x256xbf16, #tpu.memory_space<vmem>>, %arg2: memref<128x256xbf16, #tpu.memory_space<vmem>>, %arg3: memref<1x128xf32, #tpu.memory_space<vmem>>, %arg4: memref<16x128xf32, #tpu.memory_space<vmem>>) attributes {dimension_semantics = [#tpu.dimension_semantics<parallel>], iteration_bounds = array<i64: 1>, scalar_prefetch = 0 : i64, scratch_operands = 0 : i64, tpu.core_type = #tpu.core_type<tc>, window_params = [{transform_indices = @transform_0, window_bounds = array<i64: 16, 256>}, {pipeline_mode = #tpu.pipeline_mode<synchronous>, transform_indices = @transform_1, window_bounds = array<i64: 128, 256>}, {pipeline_mode = #tpu.pipeline_mode<synchronous>, transform_indices = @transform_2, window_bounds = array<i64: 1, 128>}, {transform_indices = @transform_3, window_bounds = array<i64: 16, 128>}]} {
    %c0 = arith.constant 0 : index
    %c0_0 = arith.constant 0 : index
    %0 = vector.load %arg1[%c0, %c0_0] : memref<16x256xbf16, #tpu.memory_space<vmem>>, vector<16x256xbf16>
    %c0_1 = arith.constant 0 : index
    %c0_2 = arith.constant 0 : index
    %1 = vector.load %arg2[%c0_1, %c0_2] : memref<128x256xbf16, #tpu.memory_space<vmem>>, vector<128x256xbf16>
    %cst = arith.constant dense<0.000000e+00> : vector<16x128xf32>
    %2 = tpu.matmul %0, %1, %cst {dimension_numbers = #tpu.dot_dimension_numbers<[1], [1], [0], [0], [0, 0, 1, 0], [], []>} : vector<16x256xbf16>, vector<128x256xbf16>, vector<16x128xf32> -> vector<16x128xf32>
    %c0_3 = arith.constant 0 : index
    %c0_4 = arith.constant 0 : index
    %3 = vector.load %arg3[%c0_3, %c0_4] : memref<1x128xf32, #tpu.memory_space<vmem>>, vector<1x128xf32>
    %4 = vector.broadcast %3 : vector<1x128xf32> to vector<16x128xf32>
    %5 = arith.addf %2, %4 : vector<16x128xf32>
    %c0_5 = arith.constant 0 : index
    %c0_6 = arith.constant 0 : index
    %6 = vector.load %arg4[%c0_5, %c0_6] : memref<16x128xf32, #tpu.memory_space<vmem>>, vector<16x128xf32>
    tpu.vector_store %arg4[%c0_5, %c0_6], %5 {strides = array<i32>} : memref<16x128xf32, #tpu.memory_space<vmem>>, vector<16x128xf32>,
    return
  }
  func.func @transform_0(%arg0: i32) -> (i32, i32) {
    %c0_i32 = arith.constant 0 : i32
    %c0_i32_0 = arith.constant 0 : i32
    return %arg0, %c0_i32 : i32, i32
  }
  func.func @transform_1(%arg0: i32) -> (i32, i32) {
    %c0_i32 = arith.constant 0 : i32
    %c0_i32_0 = arith.constant 0 : i32
    %c0_i32_1 = arith.constant 0 : i32
    return %c0_i32, %c0_i32_0 : i32, i32
  }
  func.func @transform_2(%arg0: i32) -> (i32, i32) {
    %c0_i32 = arith.constant 0 : i32
    %c0_i32_0 = arith.constant 0 : i32
    %c0_i32_1 = arith.constant 0 : i32
    return %c0_i32, %c0_i32_0 : i32, i32
  }
  func.func @transform_3(%arg0: i32) -> (i32, i32) {
    %c0_i32 = arith.constant 0 : i32
    %c0_i32_0 = arith.constant 0 : i32
    return %arg0, %c0_i32 : i32, i32
  }
}

</mosaic_0001>

<llo_original>
// kernel: tpu_custom_call.1
$region0: #{tpu_custom_call.1}
  #allocation0 [shape = 'u32[]', space=smem, size = 0x4, offset = 0x4, fixed_abs, tag = 'smem constant byte address 0x4 - core index']
  #allocation1 [shape = 'u32[144,128]{1,0:T(1,128)}', space=vmem, size = 0x12000, scoped, tag = 'internal scratch']
  %s0 = inlined_call_operand.hbm [shape: bf16[16,256], index: 0, kind: input, shape index: {}]
  %s1 = inlined_call_operand.hbm [shape: bf16[128,256], index: 1, kind: input, shape index: {}]
  %s2 = inlined_call_operand.vmem [shape: f32[1,128], index: 2, kind: input, shape index: {}]
  %s3 = inlined_call_operand.hbm [shape: f32[16,128], index: 3, kind: output, shape index: {}]
  %s4 = sld [smem:[#allocation0]]
  $region30: #{tpu_custom_call.1} parent=0
    _
  %s6 = ssub.s32 1, %s4
  %s7 = scalar_select 0, %s6, %s4
  $region1: #{tpu_custom_call.1} parent=0
    #allocation2 [shape = 'u8[8192]{0}', space=vmem, size = 0x2000, scoped, tag = 'input window, operand 0, single buffered']
    #allocation3 [shape = 's32[1]{0}', space=sflag, size = 0x4, scoped, tag = 'scoped memory for tpu_custom_call.1']
    #allocation4 [shape = 's32[1]{0}', space=sflag, size = 0x4, scoped, tag = 'scoped memory for tpu_custom_call.1']
    #allocation5 [shape = 'u8[65536]{0}', space=vmem, size = 0x10000, scoped, tag = 'input window, operand 1, single buffered']
    #allocation6 [shape = 's32[1]{0}', space=sflag, size = 0x4, scoped, tag = 'scoped memory for tpu_custom_call.1']
    #allocation7 [shape = 'u8[8192]{0}', space=vmem, size = 0x2000, scoped, tag = 'output window, operand 0, single buffered']
    %8 = vsyncpa [#allocation3], 0
    %9 = vsyncpa [#allocation6], 0
    %10 = vsyncpa [#allocation4], 0
    // Predicated region
    $region2: #{tpu_custom_call.1} parent=1 // pred_check
      _
    $region3: #{tpu_custom_call.1} parent=1 // pred_check_branch
      %12 = sbr.rel (0) target = $region5
    $region4: #{tpu_custom_call.1} parent=1 // pred_region
      %s14 = ssub.s32 256, 256
      %15 = vsyncadd [#allocation3], %s14
      %s16 = sshll.u32 [#allocation2], 4
      %s17 = int_to_ptr.vmem [resolvable:$true] %s16
      %22 = dma.hbm_to_vmem [thread:$0]  %s0, 256, %s17, [#allocation3], 128, 128, 8
    $region5: #{tpu_custom_call.1} parent=1 // pred_fallthru
      _
    // Predicated region
    $region6: #{tpu_custom_call.1} parent=1 // pred_check
      _
    $region7: #{tpu_custom_call.1} parent=1 // pred_check_branch
      %24 = sbr.rel (0) target = $region9
    $region8: #{tpu_custom_call.1} parent=1 // pred_region
      %s26 = ssub.s32 2048, 2048
      %27 = vsyncadd [#allocation6], %s26
      %s28 = sshll.u32 [#allocation5], 4
      %s29 = int_to_ptr.vmem [resolvable:$true] %s28
      %34 = dma.hbm_to_vmem [thread:$0]  %s1, 2048, %s29, [#allocation6], 128, 128, 8
    $region9: #{tpu_custom_call.1} parent=1 // pred_fallthru
      _
    // Predicated region
    $region10: #{tpu_custom_call.1} parent=1 // pred_check
      _
    $region11: #{tpu_custom_call.1} parent=1 // pred_check_branch
      %36 = sbr.rel (0) target = $region13
    $region12: #{tpu_custom_call.1} parent=1 // pred_region
      _
    $region13: #{tpu_custom_call.1} parent=1 // pred_fallthru
      _
    // Predicated region
    $region14: #{tpu_custom_call.1} parent=1 // pred_check
      _
    $region15: #{tpu_custom_call.1} parent=1 // pred_check_branch
      %38 = sbr.rel (0) target = $region17
    $region16: #{tpu_custom_call.1} parent=1 // pred_region
      %39 = dma.done [#allocation3], 256
    $region17: #{tpu_custom_call.1} parent=1 // pred_fallthru
      _
    // Predicated region
    $region18: #{tpu_custom_call.1} parent=1 // pred_check
      _
    $region19: #{tpu_custom_call.1} parent=1 // pred_check_branch
      %41 = sbr.rel (0) target = $region21
    $region20: #{tpu_custom_call.1} parent=1 // pred_region
      %42 = dma.done [#allocation6], 2048
    $region21: #{tpu_custom_call.1} parent=1 // pred_fallthru
      _
    %v44 = vld [vmem:[#allocation2] sm:$0xff]
    %v45 = vld [vmem:[#allocation2 + $0x8] sm:$0xff]
    %v46 = vld [vmem:[#allocation5] sm:$0xff]
    %v47 = vld [vmem:[#allocation5 + $0x8] sm:$0xff]
    %v48 = vld [vmem:[#allocation5 + $0x10] sm:$0xff]
    %v49 = vld [vmem:[#allocation5 + $0x18] sm:$0xff]
    %v50 = vld [vmem:[#allocation5 + $0x20] sm:$0xff]
    %v51 = vld [vmem:[#allocation5 + $0x28] sm:$0xff]
    %v52 = vld [vmem:[#allocation5 + $0x30] sm:$0xff]
    %v53 = vld [vmem:[#allocation5 + $0x38] sm:$0xff]
    %v54 = vld [vmem:[#allocation5 + $0x40] sm:$0xff]
    %v55 = vld [vmem:[#allocation5 + $0x48] sm:$0xff]
    %v56 = vld [vmem:[#allocation5 + $0x50] sm:$0xff]
    %v57 = vld [vmem:[#allocation5 + $0x58] sm:$0xff]
    %v58 = vld [vmem:[#allocation5 + $0x60] sm:$0xff]
    %v59 = vld [vmem:[#allocation5 + $0x68] sm:$0xff]
    %v60 = vld [vmem:[#allocation5 + $0x70] sm:$0xff]
    %v61 = vld [vmem:[#allocation5 + $0x78] sm:$0xff]
    %v62 = vld [vmem:[%s2] sm:$0x1]
    %v64 = vlaneseq
    %v65 = vshrl.u32 %v64, 7
    %v66 = vsub.s32 0, %v65
    %v67 = vrot.slane %v62, %v66
    %v71 = vunpack.c.l.b16 %v44
    %v72 = vunpack.c.h.b16 %v44
    %v73 = vunpack.c.l.b16 %v45
    %v74 = vunpack.c.h.b16 %v45
    %v75 = vpack.c.b16 %v73, %v71
    %v76 = vpack.c.b16 %v74, %v72
    %v95 = vunpack.c.l.b16 %v46
    %v96 = vunpack.c.h.b16 %v46
    %v97 = vunpack.c.l.b16 %v47
    %v98 = vunpack.c.h.b16 %v47
    %v99 = vunpack.c.l.b16 %v48
    %v100 = vunpack.c.h.b16 %v48
    %v101 = vunpack.c.l.b16 %v49
    %v102 = vunpack.c.h.b16 %v49
    %v103 = vunpack.c.l.b16 %v50
    %v104 = vunpack.c.h.b16 %v50
    %v105 = vunpack.c.l.b16 %v51
    %v106 = vunpack.c.h.b16 %v51
    %v107 = vunpack.c.l.b16 %v52
    %v108 = vunpack.c.h.b16 %v52
    %v109 = vunpack.c.l.b16 %v53
    %v110 = vunpack.c.h.b16 %v53
    %v111 = vunpack.c.l.b16 %v54
    %v112 = vunpack.c.h.b16 %v54
    %v113 = vunpack.c.l.b16 %v55
    %v114 = vunpack.c.h.b16 %v55
    %v115 = vunpack.c.l.b16 %v56
    %v116 = vunpack.c.h.b16 %v56
    %v117 = vunpack.c.l.b16 %v57
    %v118 = vunpack.c.h.b16 %v57
    %v119 = vunpack.c.l.b16 %v58
    %v120 = vunpack.c.h.b16 %v58
    %v121 = vunpack.c.l.b16 %v59
    %v122 = vunpack.c.h.b16 %v59
    %v123 = vunpack.c.l.b16 %v60
    %v124 = vunpack.c.h.b16 %v60
    %v125 = vunpack.c.l.b16 %v61
    %v126 = vunpack.c.h.b16 %v61
    %v127 = vpack.c.b16 %v97, %v95
    %v128 = vpack.c.b16 %v98, %v96
    %v129 = vpack.c.b16 %v101, %v99
    %v130 = vpack.c.b16 %v102, %v100
    %v131 = vpack.c.b16 %v105, %v103
    %v132 = vpack.c.b16 %v106, %v104
    %v133 = vpack.c.b16 %v109, %v107
    %v134 = vpack.c.b16 %v110, %v108
    %v135 = vpack.c.b16 %v113, %v111
    %v136 = vpack.c.b16 %v114, %v112
    %v137 = vpack.c.b16 %v117, %v115
    %v138 = vpack.c.b16 %v118, %v116
    %v139 = vpack.c.b16 %v121, %v119
    %v140 = vpack.c.b16 %v122, %v120
    %v141 = vpack.c.b16 %v125, %v123
    %v142 = vpack.c.b16 %v126, %v124
    %159 = vmatprep.subr.bf16.mxu0 %v128
    %160 = vmatpush1.bf16.xpose.msra.mxu0 %v127
    %161 = vmatprep.subr.bf16.mxu0 %v130
    %162 = vmatpush1.bf16.xpose.msra.mxu0 %v129
    %163 = vmatprep.subr.bf16.mxu0 %v132
    %164 = vmatpush1.bf16.xpose.msra.mxu0 %v131
    %165 = vmatprep.subr.bf16.mxu0 %v134
    %166 = vmatpush1.bf16.xpose.msra.mxu0 %v133
    %167 = vmatprep.subr.bf16.mxu0 %v136
    %168 = vmatpush1.bf16.xpose.msra.mxu0 %v135
    %169 = vmatprep.subr.bf16.mxu0 %v138
    %170 = vmatpush1.bf16.xpose.msra.mxu0 %v137
    %171 = vmatprep.subr.bf16.mxu0 %v140
    %172 = vmatpush1.bf16.xpose.msra.mxu0 %v139
    %173 = vmatprep.subr.bf16.mxu0 %v142
    %174 = vmatpush1.bf16.xpose.msra.mxu0 %v141
    %175 = vmatprep.subr.bf16.mxu0 0
    %176 = vmatpush1.bf16.xpose.msra.mxu0 0
    %177 = vmatprep.subr.bf16.mxu0 0
    %178 = vmatpush1.bf16.xpose.msra.mxu0 0
    %179 = vmatprep.subr.bf16.mxu0 0
    %180 = vmatpush1.bf16.xpose.msra.mxu0 0
    %181 = vmatprep.subr.bf16.mxu0 0
    %182 = vmatpush1.bf16.xpose.msra.mxu0 0
    %183 = vmatprep.subr.bf16.mxu0 0
    %184 = vmatpush1.bf16.xpose.msra.mxu0 0
    %185 = vmatprep.subr.bf16.mxu0 0
    %186 = vmatpush1.bf16.xpose.msra.mxu0 0
    %187 = vmatprep.subr.bf16.mxu0 0
    %188 = vmatpush1.bf16.xpose.msra.mxu0 0
    %189 = vmatprep.subr.bf16.mxu0 0
    %190 = vmatpush1.bf16.xpose.msra.mxu0 0
    %191 = vmatprep.mubr.bf16.mxu0 %v76
    %192 = vmatmul.mubr.bf16.gmra.mrb[0].mxu0 %v75
    %v193 = vpop.f32.mrb[0].mxu0
    %v194 = vadd.f32 %v67, %v193
    %v195 = vpop.f32.mrb[0].mxu0
    %v196 = vpop.f32.mrb[0].mxu0
    %v197 = vadd.f32 %v67, %v196
    %v198 = vpop.f32.mrb[0].mxu0
    %199 = vdwg.mxu0
    %200 = vst [vmem:[#allocation7] sm:$0xff] %v194
    %201 = vst [vmem:[#allocation7 + $0x8] sm:$0xff] %v197
    // Predicated region
    $region22: #{tpu_custom_call.1} parent=1 // pred_check
      _
    $region23: #{tpu_custom_call.1} parent=1 // pred_check_branch
      %203 = sbr.rel (0) target = $region25
    $region24: #{tpu_custom_call.1} parent=1 // pred_region
      %s205 = ssub.s32 256, 256
      %206 = vsyncadd [#allocation4], %s205
      %s207 = sshll.u32 [#allocation7], 4
      %s208 = int_to_ptr.vmem [resolvable:$true] %s207
      %213 = dma.vmem_to_hbm [thread:$0]  %s208, 256, %s3, [#allocation4], 128, 128, 8
    $region25: #{tpu_custom_call.1} parent=1 // pred_fallthru
      _
    // Predicated region
    $region26: #{tpu_custom_call.1} parent=1 // pred_check
      _
    $region27: #{tpu_custom_call.1} parent=1 // pred_check_branch
      %215 = sbr.rel (0) target = $region29
    $region28: #{tpu_custom_call.1} parent=1 // pred_region
      %216 = dma.done [#allocation4], 256
    $region29: #{tpu_custom_call.1} parent=1 // pred_fallthru
      _
    %217 = vsyncpa [#allocation3], 1
    %218 = vsyncpa [#allocation6], 1
    %219 = vsyncpa [#allocation4], 1

</llo_original>
